<compile_context>
chip_gen: v5e
topology: v5e:2x2
jax: 0.10.0
libtpu: 0.0.40
codegen_flags: <defaults>
</compile_context>

<pallas_src>
import jax
import jax.numpy as jnp
from jax import lax
from jax.experimental import pallas as pl
from jax.experimental.pallas import tpu as pltpu

# ---------------- configuration (mirrors Decoder.__init__ arguments) ----------
DIM_Z = 32
DIMS_SHARED_DEC = [64]                       # hidden dims of shared MLP
DIMS_X = {"rna": [48], "atac": [24, 24, 24]} # atac has multiple output chunks
DIMS_H = {"rna": [32], "atac": [48]}
DIMS_AFTER_DEC_ATAC = [16, 32]               # chunk size 16, hidden 32
DISTRIBUTIONS = {"rna": "POISSON", "atac": "BERNOULLI"}
LN_EPS = 1e-5

N_CHUNKS_ATAC = len(DIMS_X["atac"])                # 3
TOTAL_H = sum(d[0] for d in DIMS_H.values())       # 80
D_RNA = DIMS_H["rna"][0]                           # 32
ATAC_OUT = N_CHUNKS_ATAC * DIMS_X["atac"][0]       # 72

# bf16 MXU operands (f32 accumulation) -- flip back to jnp.float32 for
# bit-tight parity with the pure-f32 reference.
MATMUL_DTYPE = jnp.bfloat16

DEFAULT_TILE = 2048                # max batch rows per grid step
MIN_TILE = 256                     # don't split below this (per-step overhead)
VMEM_LIMIT_BYTES = 32 * 1024 * 1024


# ---------------- shared math helpers ------------------------------------------
def _layer_norm(x, gamma, beta):
    mean = jnp.mean(x, axis=-1, keepdims=True)
    var = jnp.mean(jnp.square(x - mean), axis=-1, keepdims=True)
    return (x - mean) * lax.rsqrt(var + LN_EPS) * gamma + beta


def _mish_ref(x):
    # torch.nn.Mish: x * tanh(softplus(x))  (used by the pure-JAX references)
    return x * jnp.tanh(jnp.logaddexp(x, 0.0))


# ---------------- kernel-only math helpers --------------------------------------
def _fast_recip(x):
    # EUP approx reciprocal (vrcp, otherwise-idle slot) + 1 Newton step
    # (~1e-7 rel err) instead of the full VPU divide sequence.
    r = pl.reciprocal(x, approx=True)
    return r * (2.0 - x * r)


def _mish_fast(x):
    # mish(x) = x*tanh(softplus(x)) = x*((1+e^x)^2 - 1)/((1+e^x)^2 + 1)
    # 1 EUP exp + EUP reciprocal; clamp is exact (ratio == 1 in f32 for x>=20).
    n = jnp.square(1.0 + jnp.exp(jnp.minimum(x, 20.0)))
    return x * (n - 1.0) * _fast_recip(n + 1.0)


def _sigmoid_fast(x):
    # sigmoid(x) = 1/(1+e^{-x}); clamp keeps e^{-x} finite (x<-30 -> ~1e-13).
    e = jnp.exp(-jnp.maximum(x, -30.0))
    return _fast_recip(1.0 + e)


# ---------------- Pallas kernel: whole decoder forward pass --------------------
def decoder_kernel(z_ref,
                   w1_ref, b1_ref, g1_ref, be1_ref,
                   w2_ref, b2_ref,
                   a_g_ref, a_b_ref,
                   wp1_ref, bp1_ref, gp_ref, bep_ref,
                   wp2_ref, bp2_ref, sg_ref,
                   rna_ref, atac_ref):
    # weights (w*_ref) are pre-cast to MATMUL_DTYPE in the wrapper; only the
    # per-step activations need an in-kernel cast.
    z = z_ref[...].astype(MATMUL_DTYPE)

    # shared_decoder MLP: Linear -> LN -> Mish -> (Dropout=id) -> Linear
    h = jnp.dot(z, w1_ref[...], preferred_element_type=jnp.float32) + b1_ref[...]
    h = _mish_fast(_layer_norm(h, g1_ref[...], be1_ref[...]))
    shared = jnp.dot(h.astype(MATMUL_DTYPE), w2_ref[...],
                     preferred_element_type=jnp.float32) + b2_ref[...]

    # split by dims_h (dict order): rna = lanes [0,32), atac = lanes [32,80)
    rna_ref[...] = jnp.exp(shared[:, :D_RNA])              # POISSON -> exp

    # atac before_concat: LayerNorm -> relu (out_trans) -> (Dropout=id)
    a = _layer_norm(shared[:, D_RNA:], a_g_ref[...], a_b_ref[...])
    a = jnp.maximum(a, 0.0)

    # 3 per-chunk post-decoders fused via block-diagonal weights:
    #   Linear (48->96 blkdiag) -> grouped LN (32-wide groups via selector
    #   matmul, f32) -> Mish -> Linear (96->72 blkdiag)
    t = jnp.dot(a.astype(MATMUL_DTYPE), wp1_ref[...],
                preferred_element_type=jnp.float32) + bp1_ref[...]
    sg = sg_ref[...]                                        # (96,96), 1/32 per group
    mean = jnp.dot(t, sg, preferred_element_type=jnp.float32)
    cen = t - mean
    var = jnp.dot(cen * cen, sg, preferred_element_type=jnp.float32)
    t = _mish_fast(cen * lax.rsqrt(var + LN_EPS) * gp_ref[...] + bep_ref[...])
    o = jnp.dot(t.astype(MATMUL_DTYPE), wp2_ref[...],
                preferred_element_type=jnp.float32) + bp2_ref[...]
    atac_ref[...] = _sigmoid_fast(o)                        # BERNOULLI -> sigmoid


# ---------------- parameter packing (block-diag, grouping, bf16 pre-cast) ------
def _block_diag(blocks):
    n, r, c = blocks.shape
    out = jnp.zeros((n * r, n * c), blocks.dtype)
    for i in range(n):
        out = out.at[i * r:(i + 1) * r, i * c:(i + 1) * c].set(blocks[i])
    return out


def _pack_params(p):
    n, _, hh = p["wp1"].shape
    d_out = p["wp2"].shape[-1]
    gid = jnp.arange(n * hh) // hh
    sg = (gid[:, None] == gid[None, :]).astype(jnp.float32) / float(hh)
    wd = MATMUL_DTYPE
    return {
        # matmul weights pre-cast once (halves VMEM weight footprint, no
        # per-step VPU cast work); biases / LN params / selector stay f32.
        "w1": p["w1"].astype(wd),
        "w2": p["w2"].astype(wd),
        "wp1_blk": _block_diag(p["wp1"]).astype(wd),         # (48, 96)
        "wp2_blk": _block_diag(p["wp2"]).astype(wd),         # (96, 72)
        "bp1": p["bp1"].reshape(1, n * hh),
        "gp": p["gp"].reshape(1, n * hh),
        "bep": p["bep"].reshape(1, n * hh),
        "bp2": p["bp2"].reshape(1, n * d_out),
        "sg": sg,                                            # (96, 96)
    }


# ---------------- wrapper -------------------------------------------------------
def _round_up(n, m):
    return ((n + m - 1) // m) * m


def _choose_tile(batch, max_tile):
    """Pick (tile_rows, padded_batch).

    * rows per step are a multiple of 8 (sublane) and <= max_tile
    * padding is < 8*n_steps rows (no round_up(B, T) waste)
    * prefer an even number of (>=2) steps when the batch is big enough so the
      "parallel" grid axis keeps both v7x TensorCores busy.
    """
    b8 = _round_up(max(batch, 1), 8)
    n_steps = pl.cdiv(b8, max_tile)
    if n_steps == 1 and b8 >= 2 * MIN_TILE:
        n_steps = 2
    elif n_steps > 1 and n_steps % 2 == 1 and pl.cdiv(b8, n_steps + 1) >= MIN_TILE:
        n_steps += 1
    tile = _round_up(pl.cdiv(b8, n_steps), 8)
    return tile, n_steps * tile


def decoder_forward(z, params, max_tile=DEFAULT_TILE):
    B = z.shape[0]
    T, Bp = _choose_tile(B, max_tile)
    if Bp != B:
        z = jnp.pad(z, ((0, Bp - B), (0, 0)))

    packed = _pack_params(params)
    inputs = (z,
              packed["w1"], params["b1"], params["g1"], params["be1"],
              packed["w2"], params["b2"],
              params["atac_ln_g"], params["atac_ln_b"],
              packed["wp1_blk"], packed["bp1"], packed["gp"], packed["bep"],
              packed["wp2_blk"], packed["bp2"], packed["sg"])

    # weights: full-block, constant index_map -> VMEM-resident, no re-DMA per step
    def const_spec(p):
        return pl.BlockSpec(p.shape, lambda i, nd=p.ndim: (0,) * nd)

    in_specs = [pl.BlockSpec((T, DIM_Z), lambda i: (i, 0))]
    in_specs += [const_spec(p) for p in inputs[1:]]

    out_rna, out_atac = pl.pallas_call(
        decoder_kernel,
        out_shape=(jax.ShapeDtypeStruct((Bp, D_RNA), jnp.float32),
                   jax.ShapeDtypeStruct((Bp, ATAC_OUT), jnp.float32)),
        grid=(Bp // T,),
        in_specs=in_specs,
        out_specs=(pl.BlockSpec((T, D_RNA), lambda i: (i, 0)),
                   pl.BlockSpec((T, ATAC_OUT), lambda i: (i, 0))),
        compiler_params=pltpu.CompilerParams(
            dimension_semantics=("parallel",),        # dual-TC sharding on v7x
            vmem_limit_bytes=VMEM_LIMIT_BYTES),
    )(*inputs)

    if Bp != B:                                       # only slice when padded
        out_rna, out_atac = out_rna[:B], out_atac[:B]
    return {"rna": out_rna, "atac": out_atac}


# ---------------- deterministic parameter init ----------------------------------
def init_params(key):
    H1 = DIMS_SHARED_DEC[0]
    c, hh = DIMS_AFTER_DEC_ATAC
    d_out = DIMS_X["atac"][0]
    n = N_CHUNKS_ATAC
    ks = jax.random.split(key, 14)

    def lin(k, fi, fo):
        return jax.random.normal(k, (fi, fo), jnp.float32) / jnp.sqrt(float(fi))

    return {
        "w1": lin(ks[0], DIM_Z, H1),
        "b1": 0.01 * jax.random.normal(ks[1], (1, H1), jnp.float32),
        "g1": 1.0 + 0.1 * jax.random.normal(ks[2], (1, H1), jnp.float32),
        "be1": 0.1 * jax.random.normal(ks[3], (1, H1), jnp.float32),
        "w2": lin(ks[4], H1, TOTAL_H),
        "b2": 0.01 * jax.random.normal(ks[5], (1, TOTAL_H), jnp.float32),
        "atac_ln_g": 1.0 + 0.1 * jax.random.normal(ks[6], (1, DIMS_H["atac"][0]), jnp.float32),
        "atac_ln_b": 0.1 * jax.random.normal(ks[7], (1, DIMS_H["atac"][0]), jnp.float32),
        "wp1": jax.random.normal(ks[8], (n, c, hh), jnp.float32) / jnp.sqrt(float(c)),
        "bp1": 0.01 * jax.random.normal(ks[9], (n, hh), jnp.float32),
        "gp": 1.0 + 0.1 * jax.random.normal(ks[10], (n, hh), jnp.float32),
        "bep": 0.1 * jax.random.normal(ks[11], (n, hh), jnp.float32),
        "wp2": jax.random.normal(ks[12], (n, hh, d_out), jnp.float32) / jnp.sqrt(float(hh)),
        "bp2": 0.01 * jax.random.normal(ks[13], (n, d_out), jnp.float32),
    }


# ---------------- pure-JAX references --------------------------------------------
def _reference(z, p, matmul_dtype):
    """Module semantics; `matmul_dtype` controls the matmul operand precision
    (f32 accumulation always)."""
    def mm(a, b):
        return jnp.dot(a.astype(matmul_dtype), b.astype(matmul_dtype),
                       preferred_element_type=jnp.float32)
    h = mm(z, p["w1"]) + p["b1"]
    h = _mish_ref(_layer_norm(h, p["g1"], p["be1"]))
    shared = mm(h, p["w2"]) + p["b2"]
    rna = jnp.exp(shared[:, :D_RNA])
    a = _layer_norm(shared[:, D_RNA:], p["atac_ln_g"], p["atac_ln_b"])
    a = jnp.maximum(a, 0.0)
    c = DIMS_AFTER_DEC_ATAC[0]
    outs = []
    for i in range(N_CHUNKS_ATAC):
        t = mm(a[:, i * c:(i + 1) * c], p["wp1"][i]) + p["bp1"][i]
        t = _mish_ref(_layer_norm(t, p["gp"][i], p["bep"][i]))
        outs.append(jax.nn.sigmoid(mm(t, p["wp2"][i]) + p["bp2"][i]))
    return {"rna": rna, "atac": jnp.concatenate(outs, axis=1)}


def decoder_reference(z, p):
    # exact f32 reference (same math as the PyTorch module)
    return _reference(z, p, jnp.float32)


def decoder_reference_mixed(z, p):
    # same matmul-operand precision as the kernel (tight structural check)
    return _reference(z, p, MATMUL_DTYPE)


# ---------------- main -----------------------------------------------------------
if __name__ == "__main__":
    key = jax.random.PRNGKey(0)
    k_z, k_p, k_z2 = jax.random.split(key, 3)
    params = init_params(k_p)

    if MATMUL_DTYPE == jnp.float32:
        tol_struct = dict(atol=1e-4, rtol=1e-4)
        tol_exact = dict(atol=1e-4, rtol=1e-4)
    else:
        # bf16 re-rounding of mathematically-equal intermediates can flip an
        # operand by 1 bf16 ulp -> ~1e-3 after the Poisson exp head; vs the
        # exact f32 reference the bf16-operand noise itself is ~1e-2 max-norm.
        tol_struct = dict(atol=5e-3, rtol=5e-3)
        tol_exact = dict(atol=5e-2, rtol=5e-2)

    def check(out, ref, ref_mx):
        for m in ref:
            assert out[m].shape == ref[m].shape, (m, out[m].shape, ref[m].shape)
            assert jnp.allclose(out[m], ref_mx[m], **tol_struct), (m, "struct")
            assert jnp.allclose(out[m], ref[m], **tol_exact), (m, "exact")

    # small demo batch (single grid step)
    B = 8
    latent_data = jax.random.normal(k_z, (B, DIM_Z), dtype=jnp.float32)
    out = jax.block_until_ready(decoder_forward(latent_data, params))
    check(out, decoder_reference(latent_data, params),
          decoder_reference_mixed(latent_data, params))

    # larger batch exercising the multi-step (even) parallel grid path
    B2 = 1040
    z_big = jax.random.normal(k_z2, (B2, DIM_Z), dtype=jnp.float32)
    out2 = jax.block_until_ready(decoder_forward(z_big, params))
    check(out2, decoder_reference(z_big, params),
          decoder_reference_mixed(z_big, params))

    print("KERNEL_OK")
</pallas_src>

<mosaic_0001>
module attributes {stable_mosaic.version = 11 : i64} {
  func.func @decoder_kernel(%arg0: i32, %arg1: memref<8x32xf32, #tpu.memory_space<vmem>>, %arg2: memref<32x64xbf16, #tpu.memory_space<vmem>>, %arg3: memref<1x64xf32, #tpu.memory_space<vmem>>, %arg4: memref<1x64xf32, #tpu.memory_space<vmem>>, %arg5: memref<1x64xf32, #tpu.memory_space<vmem>>, %arg6: memref<64x80xbf16, #tpu.memory_space<vmem>>, %arg7: memref<1x80xf32, #tpu.memory_space<vmem>>, %arg8: memref<1x48xf32, #tpu.memory_space<vmem>>, %arg9: memref<1x48xf32, #tpu.memory_space<vmem>>, %arg10: memref<48x96xbf16, #tpu.memory_space<vmem>>, %arg11: memref<1x96xf32, #tpu.memory_space<vmem>>, %arg12: memref<1x96xf32, #tpu.memory_space<vmem>>, %arg13: memref<1x96xf32, #tpu.memory_space<vmem>>, %arg14: memref<96x72xbf16, #tpu.memory_space<vmem>>, %arg15: memref<1x72xf32, #tpu.memory_space<vmem>>, %arg16: memref<96x96xf32, #tpu.memory_space<vmem>>, %arg17: memref<8x32xf32, #tpu.memory_space<vmem>>, %arg18: memref<8x72xf32, #tpu.memory_space<vmem>>) attributes {dimension_semantics = [#tpu.dimension_semantics<parallel>], iteration_bounds = array<i64: 1>, scalar_prefetch = 0 : i64, scratch_operands = 0 : i64, tpu.core_type = #tpu.core_type<tc>, window_params = [{transform_indices = @transform_0, window_bounds = array<i64: 8, 32>}, {pipeline_mode = #tpu.pipeline_mode<synchronous>, transform_indices = @transform_1, window_bounds = array<i64: 32, 64>}, {pipeline_mode = #tpu.pipeline_mode<synchronous>, transform_indices = @transform_2, window_bounds = array<i64: 1, 64>}, {pipeline_mode = #tpu.pipeline_mode<synchronous>, transform_indices = @transform_3, window_bounds = array<i64: 1, 64>}, {pipeline_mode = #tpu.pipeline_mode<synchronous>, transform_indices = @transform_4, window_bounds = array<i64: 1, 64>}, {pipeline_mode = #tpu.pipeline_mode<synchronous>, transform_indices = @transform_5, window_bounds = array<i64: 64, 80>}, {pipeline_mode = #tpu.pipeline_mode<synchronous>, transform_indices = @transform_6, window_bounds = array<i64: 1, 80>}, {pipeline_mode = #tpu.pipeline_mode<synchronous>, transform_indices = @transform_7, window_bounds = array<i64: 1, 48>}, {pipeline_mode = #tpu.pipeline_mode<synchronous>, transform_indices = @transform_8, window_bounds = array<i64: 1, 48>}, {pipeline_mode = #tpu.pipeline_mode<synchronous>, transform_indices = @transform_9, window_bounds = array<i64: 48, 96>}, {pipeline_mode = #tpu.pipeline_mode<synchronous>, transform_indices = @transform_10, window_bounds = array<i64: 1, 96>}, {pipeline_mode = #tpu.pipeline_mode<synchronous>, transform_indices = @transform_11, window_bounds = array<i64: 1, 96>}, {pipeline_mode = #tpu.pipeline_mode<synchronous>, transform_indices = @transform_12, window_bounds = array<i64: 1, 96>}, {pipeline_mode = #tpu.pipeline_mode<synchronous>, transform_indices = @transform_13, window_bounds = array<i64: 96, 72>}, {pipeline_mode = #tpu.pipeline_mode<synchronous>, transform_indices = @transform_14, window_bounds = array<i64: 1, 72>}, {pipeline_mode = #tpu.pipeline_mode<synchronous>, transform_indices = @transform_15, window_bounds = array<i64: 96, 96>}, {transform_indices = @transform_16, window_bounds = array<i64: 8, 32>}, {transform_indices = @transform_17, window_bounds = array<i64: 8, 72>}]} {
    %c0 = arith.constant 0 : index
    %c0_0 = arith.constant 0 : index
    %0 = vector.load %arg1[%c0, %c0_0] : memref<8x32xf32, #tpu.memory_space<vmem>>, vector<8x32xf32>
    %1 = arith.truncf %0 : vector<8x32xf32> to vector<8x32xbf16>
    %c0_1 = arith.constant 0 : index
    %c0_2 = arith.constant 0 : index
    %2 = vector.load %arg2[%c0_1, %c0_2] : memref<32x64xbf16, #tpu.memory_space<vmem>>, vector<32x64xbf16>
    %cst = arith.constant dense<0.000000e+00> : vector<8x64xf32>
    %3 = tpu.matmul %1, %2, %cst {dimension_numbers = #tpu.dot_dimension_numbers<[1], [0], [0], [1], [0, 0, 1, 1], [], []>} : vector<8x32xbf16>, vector<32x64xbf16>, vector<8x64xf32> -> vector<8x64xf32>
    %c0_3 = arith.constant 0 : index
    %c0_4 = arith.constant 0 : index
    %4 = vector.load %arg3[%c0_3, %c0_4] : memref<1x64xf32, #tpu.memory_space<vmem>>, vector<1x64xf32>
    %5 = vector.broadcast %4 : vector<1x64xf32> to vector<8x64xf32>
    %6 = arith.addf %3, %5 : vector<8x64xf32>
    %c0_5 = arith.constant 0 : index
    %c0_6 = arith.constant 0 : index
    %7 = vector.load %arg4[%c0_5, %c0_6] : memref<1x64xf32, #tpu.memory_space<vmem>>, vector<1x64xf32>
    %c0_7 = arith.constant 0 : index
    %c0_8 = arith.constant 0 : index
    %8 = vector.load %arg5[%c0_7, %c0_8] : memref<1x64xf32, #tpu.memory_space<vmem>>, vector<1x64xf32>
    %cst_9 = arith.constant dense<0.000000e+00> : vector<8xf32>
    %9 = vector.multi_reduction <add>, %6, %cst_9 [1] : vector<8x64xf32> to vector<8xf32>
    %10 = vector.shape_cast %9 : vector<8xf32> to vector<8x1xf32>
    %cst_10 = arith.constant 6.400000e+01 : f32
    %11 = vector.broadcast %cst_10 : f32 to vector<8x1xf32>
    %12 = arith.divf %10, %11 : vector<8x1xf32>
    %13 = vector.broadcast %12 : vector<8x1xf32> to vector<8x64xf32>
    %14 = arith.subf %6, %13 : vector<8x64xf32>
    %15 = arith.mulf %14, %14 : vector<8x64xf32>
    %cst_11 = arith.constant dense<0.000000e+00> : vector<8xf32>
    %16 = vector.multi_reduction <add>, %15, %cst_11 [1] : vector<8x64xf32> to vector<8xf32>
    %17 = vector.shape_cast %16 : vector<8xf32> to vector<8x1xf32>
    %cst_12 = arith.constant 6.400000e+01 : f32
    %18 = vector.broadcast %cst_12 : f32 to vector<8x1xf32>
    %19 = arith.divf %17, %18 : vector<8x1xf32>
    %20 = vector.broadcast %12 : vector<8x1xf32> to vector<8x64xf32>
    %21 = arith.subf %6, %20 : vector<8x64xf32>
    %cst_13 = arith.constant 9.99999974E-6 : f32
    %22 = vector.broadcast %cst_13 : f32 to vector<8x1xf32>
    %23 = arith.addf %19, %22 : vector<8x1xf32>
    %24 = math.rsqrt %23 : vector<8x1xf32>
    %25 = vector.broadcast %24 : vector<8x1xf32> to vector<8x64xf32>
    %26 = arith.mulf %21, %25 : vector<8x64xf32>
    %27 = vector.broadcast %7 : vector<1x64xf32> to vector<8x64xf32>
    %28 = arith.mulf %26, %27 : vector<8x64xf32>
    %29 = vector.broadcast %8 : vector<1x64xf32> to vector<8x64xf32>
    %30 = arith.addf %28, %29 : vector<8x64xf32>
    %cst_14 = arith.constant 2.000000e+01 : f32
    %31 = vector.broadcast %cst_14 : f32 to vector<8x64xf32>
    %32 = arith.minimumf %30, %31 : vector<8x64xf32>
    %33 = math.exp %32 : vector<8x64xf32>
    %cst_15 = arith.constant 1.000000e+00 : f32
    %34 = vector.broadcast %cst_15 : f32 to vector<8x64xf32>
    %35 = arith.addf %34, %33 : vector<8x64xf32>
    %36 = arith.mulf %35, %35 : vector<8x64xf32>
    %cst_16 = arith.constant 1.000000e+00 : f32
    %37 = vector.broadcast %cst_16 : f32 to vector<8x64xf32>
    %38 = arith.subf %36, %37 : vector<8x64xf32>
    %39 = arith.mulf %30, %38 : vector<8x64xf32>
    %cst_17 = arith.constant 1.000000e+00 : f32
    %40 = vector.broadcast %cst_17 : f32 to vector<8x64xf32>
    %41 = arith.addf %36, %40 : vector<8x64xf32>
    %42 = tpu.reciprocal %41 {approx = true} : vector<8x64xf32> -> vector<8x64xf32>
    %43 = arith.mulf %41, %42 : vector<8x64xf32>
    %cst_18 = arith.constant 2.000000e+00 : f32
    %44 = vector.broadcast %cst_18 : f32 to vector<8x64xf32>
    %45 = arith.subf %44, %43 : vector<8x64xf32>
    %46 = arith.mulf %42, %45 : vector<8x64xf32>
    %47 = arith.mulf %39, %46 : vector<8x64xf32>
    %48 = arith.truncf %47 : vector<8x64xf32> to vector<8x64xbf16>
    %c0_19 = arith.constant 0 : index
    %c0_20 = arith.constant 0 : index
    %49 = vector.load %arg6[%c0_19, %c0_20] : memref<64x80xbf16, #tpu.memory_space<vmem>>, vector<64x80xbf16>
    %cst_21 = arith.constant dense<0.000000e+00> : vector<8x80xf32>
    %50 = tpu.matmul %48, %49, %cst_21 {dimension_numbers = #tpu.dot_dimension_numbers<[1], [0], [0], [1], [0, 0, 1, 1], [], []>} : vector<8x64xbf16>, vector<64x80xbf16>, vector<8x80xf32> -> vector<8x80xf32>
    %c0_22 = arith.constant 0 : index
    %c0_23 = arith.constant 0 : index
    %51 = vector.load %arg7[%c0_22, %c0_23] : memref<1x80xf32, #tpu.memory_space<vmem>>, vector<1x80xf32>
    %52 = vector.broadcast %51 : vector<1x80xf32> to vector<8x80xf32>
    %53 = arith.addf %50, %52 : vector<8x80xf32>
    %54 = vector.extract_strided_slice %53 {offsets = [0, 0], sizes = [8, 32], strides = [1, 1]} : vector<8x80xf32> to vector<8x32xf32>
    %55 = math.exp %54 : vector<8x32xf32>
    %c0_24 = arith.constant 0 : index
    %c0_25 = arith.constant 0 : index
    %56 = vector.load %arg17[%c0_24, %c0_25] : memref<8x32xf32, #tpu.memory_space<vmem>>, vector<8x32xf32>
    tpu.vector_store %arg17[%c0_24, %c0_25], %55 {strides = array<i32>} : memref<8x32xf32, #tpu.memory_space<vmem>>, vector<8x32xf32>,
    %57 = vector.extract_strided_slice %53 {offsets = [0, 32], sizes = [8, 48], strides = [1, 1]} : vector<8x80xf32> to vector<8x48xf32>
    %c0_26 = arith.constant 0 : index
    %c0_27 = arith.constant 0 : index
    %58 = vector.load %arg8[%c0_26, %c0_27] : memref<1x48xf32, #tpu.memory_space<vmem>>, vector<1x48xf32>
    %c0_28 = arith.constant 0 : index
    %c0_29 = arith.constant 0 : index
    %59 = vector.load %arg9[%c0_28, %c0_29] : memref<1x48xf32, #tpu.memory_space<vmem>>, vector<1x48xf32>
    %cst_30 = arith.constant dense<0.000000e+00> : vector<8xf32>
    %60 = vector.multi_reduction <add>, %57, %cst_30 [1] : vector<8x48xf32> to vector<8xf32>
    %61 = vector.shape_cast %60 : vector<8xf32> to vector<8x1xf32>
    %cst_31 = arith.constant 4.800000e+01 : f32
    %62 = vector.broadcast %cst_31 : f32 to vector<8x1xf32>
    %63 = arith.divf %61, %62 : vector<8x1xf32>
    %64 = vector.broadcast %63 : vector<8x1xf32> to vector<8x48xf32>
    %65 = arith.subf %57, %64 : vector<8x48xf32>
    %66 = arith.mulf %65, %65 : vector<8x48xf32>
    %cst_32 = arith.constant dense<0.000000e+00> : vector<8xf32>
    %67 = vector.multi_reduction <add>, %66, %cst_32 [1] : vector<8x48xf32> to vector<8xf32>
    %68 = vector.shape_cast %67 : vector<8xf32> to vector<8x1xf32>
    %cst_33 = arith.constant 4.800000e+01 : f32
    %69 = vector.broadcast %cst_33 : f32 to vector<8x1xf32>
    %70 = arith.divf %68, %69 : vector<8x1xf32>
    %71 = vector.broadcast %63 : vector<8x1xf32> to vector<8x48xf32>
    %72 = arith.subf %57, %71 : vector<8x48xf32>
    %cst_34 = arith.constant 9.99999974E-6 : f32
    %73 = vector.broadcast %cst_34 : f32 to vector<8x1xf32>
    %74 = arith.addf %70, %73 : vector<8x1xf32>
    %75 = math.rsqrt %74 : vector<8x1xf32>
    %76 = vector.broadcast %75 : vector<8x1xf32> to vector<8x48xf32>
    %77 = arith.mulf %72, %76 : vector<8x48xf32>
    %78 = vector.broadcast %58 : vector<1x48xf32> to vector<8x48xf32>
    %79 = arith.mulf %77, %78 : vector<8x48xf32>
    %80 = vector.broadcast %59 : vector<1x48xf32> to vector<8x48xf32>
    %81 = arith.addf %79, %80 : vector<8x48xf32>
    %cst_35 = arith.constant 0.000000e+00 : f32
    %82 = vector.broadcast %cst_35 : f32 to vector<8x48xf32>
    %83 = arith.maximumf %81, %82 : vector<8x48xf32>
    %84 = arith.truncf %83 : vector<8x48xf32> to vector<8x48xbf16>
    %c0_36 = arith.constant 0 : index
    %c0_37 = arith.constant 0 : index
    %85 = vector.load %arg10[%c0_36, %c0_37] : memref<48x96xbf16, #tpu.memory_space<vmem>>, vector<48x96xbf16>
    %cst_38 = arith.constant dense<0.000000e+00> : vector<8x96xf32>
    %86 = tpu.matmul %84, %85, %cst_38 {dimension_numbers = #tpu.dot_dimension_numbers<[1], [0], [0], [1], [0, 0, 1, 1], [], []>} : vector<8x48xbf16>, vector<48x96xbf16>, vector<8x96xf32> -> vector<8x96xf32>
    %c0_39 = arith.constant 0 : index
    %c0_40 = arith.constant 0 : index
    %87 = vector.load %arg11[%c0_39, %c0_40] : memref<1x96xf32, #tpu.memory_space<vmem>>, vector<1x96xf32>
    %88 = vector.broadcast %87 : vector<1x96xf32> to vector<8x96xf32>
    %89 = arith.addf %86, %88 : vector<8x96xf32>
    %c0_41 = arith.constant 0 : index
    %c0_42 = arith.constant 0 : index
    %90 = vector.load %arg16[%c0_41, %c0_42] : memref<96x96xf32, #tpu.memory_space<vmem>>, vector<96x96xf32>
    %cst_43 = arith.constant dense<0.000000e+00> : vector<8x96xf32>
    %91 = tpu.matmul %89, %90, %cst_43 {dimension_numbers = #tpu.dot_dimension_numbers<[1], [0], [0], [1], [0, 0, 1, 1], [], []>} : vector<8x96xf32>, vector<96x96xf32>, vector<8x96xf32> -> vector<8x96xf32>
    %92 = arith.subf %89, %91 : vector<8x96xf32>
    %93 = arith.mulf %92, %92 : vector<8x96xf32>
    %cst_44 = arith.constant dense<0.000000e+00> : vector<8x96xf32>
    %94 = tpu.matmul %93, %90, %cst_44 {dimension_numbers = #tpu.dot_dimension_numbers<[1], [0], [0], [1], [0, 0, 1, 1], [], []>} : vector<8x96xf32>, vector<96x96xf32>, vector<8x96xf32> -> vector<8x96xf32>
    %cst_45 = arith.constant 9.99999974E-6 : f32
    %95 = vector.broadcast %cst_45 : f32 to vector<8x96xf32>
    %96 = arith.addf %94, %95 : vector<8x96xf32>
    %97 = math.rsqrt %96 : vector<8x96xf32>
    %98 = arith.mulf %92, %97 : vector<8x96xf32>
    %c0_46 = arith.constant 0 : index
    %c0_47 = arith.constant 0 : index
    %99 = vector.load %arg12[%c0_46, %c0_47] : memref<1x96xf32, #tpu.memory_space<vmem>>, vector<1x96xf32>
    %100 = vector.broadcast %99 : vector<1x96xf32> to vector<8x96xf32>
    %101 = arith.mulf %98, %100 : vector<8x96xf32>
    %c0_48 = arith.constant 0 : index
    %c0_49 = arith.constant 0 : index
    %102 = vector.load %arg13[%c0_48, %c0_49] : memref<1x96xf32, #tpu.memory_space<vmem>>, vector<1x96xf32>
    %103 = vector.broadcast %102 : vector<1x96xf32> to vector<8x96xf32>
    %104 = arith.addf %101, %103 : vector<8x96xf32>
    %cst_50 = arith.constant 2.000000e+01 : f32
    %105 = vector.broadcast %cst_50 : f32 to vector<8x96xf32>
    %106 = arith.minimumf %104, %105 : vector<8x96xf32>
    %107 = math.exp %106 : vector<8x96xf32>
    %cst_51 = arith.constant 1.000000e+00 : f32
    %108 = vector.broadcast %cst_51 : f32 to vector<8x96xf32>
    %109 = arith.addf %108, %107 : vector<8x96xf32>
    %110 = arith.mulf %109, %109 : vector<8x96xf32>
    %cst_52 = arith.constant 1.000000e+00 : f32
    %111 = vector.broadcast %cst_52 : f32 to vector<8x96xf32>
    %112 = arith.subf %110, %111 : vector<8x96xf32>
    %113 = arith.mulf %104, %112 : vector<8x96xf32>
    %cst_53 = arith.constant 1.000000e+00 : f32
    %114 = vector.broadcast %cst_53 : f32 to vector<8x96xf32>
    %115 = arith.addf %110, %114 : vector<8x96xf32>
    %116 = tpu.reciprocal %115 {approx = true} : vector<8x96xf32> -> vector<8x96xf32>
    %117 = arith.mulf %115, %116 : vector<8x96xf32>
    %cst_54 = arith.constant 2.000000e+00 : f32
    %118 = vector.broadcast %cst_54 : f32 to vector<8x96xf32>
    %119 = arith.subf %118, %117 : vector<8x96xf32>
    %120 = arith.mulf %116, %119 : vector<8x96xf32>
    %121 = arith.mulf %113, %120 : vector<8x96xf32>
    %122 = arith.truncf %121 : vector<8x96xf32> to vector<8x96xbf16>
    %c0_55 = arith.constant 0 : index
    %c0_56 = arith.constant 0 : index
    %123 = vector.load %arg14[%c0_55, %c0_56] : memref<96x72xbf16, #tpu.memory_space<vmem>>, vector<96x72xbf16>
    %cst_57 = arith.constant dense<0.000000e+00> : vector<8x72xf32>
    %124 = tpu.matmul %122, %123, %cst_57 {dimension_numbers = #tpu.dot_dimension_numbers<[1], [0], [0], [1], [0, 0, 1, 1], [], []>} : vector<8x96xbf16>, vector<96x72xbf16>, vector<8x72xf32> -> vector<8x72xf32>
    %c0_58 = arith.constant 0 : index
    %c0_59 = arith.constant 0 : index
    %125 = vector.load %arg15[%c0_58, %c0_59] : memref<1x72xf32, #tpu.memory_space<vmem>>, vector<1x72xf32>
    %126 = vector.broadcast %125 : vector<1x72xf32> to vector<8x72xf32>
    %127 = arith.addf %124, %126 : vector<8x72xf32>
    %cst_60 = arith.constant -3.000000e+01 : f32
    %128 = vector.broadcast %cst_60 : f32 to vector<8x72xf32>
    %129 = arith.maximumf %127, %128 : vector<8x72xf32>
    %cst_61 = arith.constant 0.000000e+00 : f32
    %130 = vector.broadcast %cst_61 : f32 to vector<8x72xf32>
    %131 = arith.subf %130, %129 : vector<8x72xf32>
    %132 = math.exp %131 : vector<8x72xf32>
    %cst_62 = arith.constant 1.000000e+00 : f32
    %133 = vector.broadcast %cst_62 : f32 to vector<8x72xf32>
    %134 = arith.addf %133, %132 : vector<8x72xf32>
    %135 = tpu.reciprocal %134 {approx = true} : vector<8x72xf32> -> vector<8x72xf32>
    %136 = arith.mulf %134, %135 : vector<8x72xf32>
    %cst_63 = arith.constant 2.000000e+00 : f32
    %137 = vector.broadcast %cst_63 : f32 to vector<8x72xf32>
    %138 = arith.subf %137, %136 : vector<8x72xf32>
    %139 = arith.mulf %135, %138 : vector<8x72xf32>
    %c0_64 = arith.constant 0 : index
    %c0_65 = arith.constant 0 : index
    %140 = vector.load %arg18[%c0_64, %c0_65] : memref<8x72xf32, #tpu.memory_space<vmem>>, vector<8x72xf32>
    tpu.vector_store %arg18[%c0_64, %c0_65], %139 {strides = array<i32>} : memref<8x72xf32, #tpu.memory_space<vmem>>, vector<8x72xf32>,
    return
  }
  func.func @transform_0(%arg0: i32) -> (i32, i32) {
    %c0_i32 = arith.constant 0 : i32
    %c0_i32_0 = arith.constant 0 : i32
    return %arg0, %c0_i32 : i32, i32
  }
  func.func @transform_1(%arg0: i32) -> (i32, i32) {
    %c0_i32 = arith.constant 0 : i32
    %c0_i32_0 = arith.constant 0 : i32
    %c0_i32_1 = arith.constant 0 : i32
    return %c0_i32, %c0_i32_0 : i32, i32
  }
  func.func @transform_2(%arg0: i32) -> (i32, i32) {
    %c0_i32 = arith.constant 0 : i32
    %c0_i32_0 = arith.constant 0 : i32
    %c0_i32_1 = arith.constant 0 : i32
    return %c0_i32, %c0_i32_0 : i32, i32
  }
  func.func @transform_3(%arg0: i32) -> (i32, i32) {
    %c0_i32 = arith.constant 0 : i32
    %c0_i32_0 = arith.constant 0 : i32
    %c0_i32_1 = arith.constant 0 : i32
    return %c0_i32, %c0_i32_0 : i32, i32
  }
  func.func @transform_4(%arg0: i32) -> (i32, i32) {
    %c0_i32 = arith.constant 0 : i32
    %c0_i32_0 = arith.constant 0 : i32
    %c0_i32_1 = arith.constant 0 : i32
    return %c0_i32, %c0_i32_0 : i32, i32
  }
  func.func @transform_5(%arg0: i32) -> (i32, i32) {
    %c0_i32 = arith.constant 0 : i32
    %c0_i32_0 = arith.constant 0 : i32
    %c0_i32_1 = arith.constant 0 : i32
    return %c0_i32, %c0_i32_0 : i32, i32
  }
  func.func @transform_6(%arg0: i32) -> (i32, i32) {
    %c0_i32 = arith.constant 0 : i32
    %c0_i32_0 = arith.constant 0 : i32
    %c0_i32_1 = arith.constant 0 : i32
    return %c0_i32, %c0_i32_0 : i32, i32
  }
  func.func @transform_7(%arg0: i32) -> (i32, i32) {
    %c0_i32 = arith.constant 0 : i32
    %c0_i32_0 = arith.constant 0 : i32
    %c0_i32_1 = arith.constant 0 : i32
    return %c0_i32, %c0_i32_0 : i32, i32
  }
  func.func @transform_8(%arg0: i32) -> (i32, i32) {
    %c0_i32 = arith.constant 0 : i32
    %c0_i32_0 = arith.constant 0 : i32
    %c0_i32_1 = arith.constant 0 : i32
    return %c0_i32, %c0_i32_0 : i32, i32
  }
  func.func @transform_9(%arg0: i32) -> (i32, i32) {
    %c0_i32 = arith.constant 0 : i32
    %c0_i32_0 = arith.constant 0 : i32
    %c0_i32_1 = arith.constant 0 : i32
    return %c0_i32, %c0_i32_0 : i32, i32
  }
  func.func @transform_10(%arg0: i32) -> (i32, i32) {
    %c0_i32 = arith.constant 0 : i32
    %c0_i32_0 = arith.constant 0 : i32
    %c0_i32_1 = arith.constant 0 : i32
    return %c0_i32, %c0_i32_0 : i32, i32
  }
  func.func @transform_11(%arg0: i32) -> (i32, i32) {
    %c0_i32 = arith.constant 0 : i32
    %c0_i32_0 = arith.constant 0 : i32
    %c0_i32_1 = arith.constant 0 : i32
    return %c0_i32, %c0_i32_0 : i32, i32
  }
  func.func @transform_12(%arg0: i32) -> (i32, i32) {
    %c0_i32 = arith.constant 0 : i32
    %c0_i32_0 = arith.constant 0 : i32
    %c0_i32_1 = arith.constant 0 : i32
    return %c0_i32, %c0_i32_0 : i32, i32
  }
  func.func @transform_13(%arg0: i32) -> (i32, i32) {
    %c0_i32 = arith.constant 0 : i32
    %c0_i32_0 = arith.constant 0 : i32
    %c0_i32_1 = arith.constant 0 : i32
    return %c0_i32, %c0_i32_0 : i32, i32
  }
  func.func @transform_14(%arg0: i32) -> (i32, i32) {
    %c0_i32 = arith.constant 0 : i32
    %c0_i32_0 = arith.constant 0 : i32
    %c0_i32_1 = arith.constant 0 : i32
    return %c0_i32, %c0_i32_0 : i32, i32
  }
  func.func @transform_15(%arg0: i32) -> (i32, i32) {
    %c0_i32 = arith.constant 0 : i32
    %c0_i32_0 = arith.constant 0 : i32
    %c0_i32_1 = arith.constant 0 : i32
    return %c0_i32, %c0_i32_0 : i32, i32
  }
  func.func @transform_16(%arg0: i32) -> (i32, i32) {
    %c0_i32 = arith.constant 0 : i32
    %c0_i32_0 = arith.constant 0 : i32
    return %arg0, %c0_i32 : i32, i32
  }
  func.func @transform_17(%arg0: i32) -> (i32, i32) {
    %c0_i32 = arith.constant 0 : i32
    %c0_i32_0 = arith.constant 0 : i32
    return %arg0, %c0_i32 : i32, i32
  }
}

</mosaic_0001>

<llo_original>
// kernel: tpu_custom_call.1
$region0: #{tpu_custom_call.1}
  #allocation0 [shape = 'u32[]', space=smem, size = 0x4, offset = 0x4, fixed_abs, tag = 'smem constant byte address 0x4 - core index']
  #allocation1 [shape = 'u32[72,128]{1,0:T(1,128)}', space=vmem, size = 0x9000, scoped, tag = 'internal scratch']
  %s0 = inlined_call_operand.hbm [shape: f32[8,32], index: 0, kind: input, shape index: {}]
  %s1 = inlined_call_operand.hbm [shape: bf16[32,64], index: 1, kind: input, shape index: {}]
  %s2 = inlined_call_operand.vmem [shape: f32[1,64], index: 2, kind: input, shape index: {}]
  %s3 = inlined_call_operand.vmem [shape: f32[1,64], index: 3, kind: input, shape index: {}]
  %s4 = inlined_call_operand.hbm [shape: f32[1,64], index: 4, kind: input, shape index: {}]
  %s5 = inlined_call_operand.hbm [shape: bf16[64,80], index: 5, kind: input, shape index: {}]
  %s6 = inlined_call_operand.hbm [shape: f32[1,80], index: 6, kind: input, shape index: {}]
  %s7 = inlined_call_operand.hbm [shape: f32[1,48], index: 7, kind: input, shape index: {}]
  %s8 = inlined_call_operand.hbm [shape: f32[1,48], index: 8, kind: input, shape index: {}]
  %s9 = inlined_call_operand.hbm [shape: bf16[48,96], index: 9, kind: input, shape index: {}]
  %s10 = inlined_call_operand.hbm [shape: f32[1,96], index: 10, kind: input, shape index: {}]
  %s11 = inlined_call_operand.hbm [shape: f32[1,96], index: 11, kind: input, shape index: {}]
  %s12 = inlined_call_operand.hbm [shape: f32[1,96], index: 12, kind: input, shape index: {}]
  %s13 = inlined_call_operand.vmem [shape: bf16[96,72], index: 13, kind: input, shape index: {}]
  %s14 = inlined_call_operand.hbm [shape: f32[1,72], index: 14, kind: input, shape index: {}]
  %s15 = inlined_call_operand.vmem [shape: f32[96,96], index: 15, kind: input, shape index: {}]
  %s16 = inlined_call_operand.hbm [shape: f32[8,32], index: 16, kind: output, shape index: {0}]
  %s17 = inlined_call_operand.hbm [shape: f32[8,72], index: 17, kind: output, shape index: {1}]
  %18 = xla_tuple %s16, %s17
  %s19 = sld [smem:[#allocation0]]
  $region130: #{tpu_custom_call.1} parent=0
    _
  %s21 = ssub.s32 1, %s19
  %s22 = scalar_select 0, %s21, %s19
  $region1: #{tpu_custom_call.1} parent=0
    #allocation2 [shape = 'u8[4096]{0}', space=vmem, size = 0x1000, scoped, tag = 'input window, operand 0, single buffered']
    #allocation3 [shape = 's32[1]{0}', space=sflag, size = 0x4, scoped, tag = 'scoped memory for tpu_custom_call.1']
    #allocation4 [shape = 's32[1]{0}', space=sflag, size = 0x4, scoped, tag = 'scoped memory for tpu_custom_call.1']
    #allocation5 [shape = 'u8[8192]{0}', space=vmem, size = 0x2000, scoped, tag = 'input window, operand 1, single buffered']
    #allocation6 [shape = 's32[1]{0}', space=sflag, size = 0x4, scoped, tag = 'scoped memory for tpu_custom_call.1']
    #allocation7 [shape = 'u8[512]{0}', space=vmem, size = 0x400, scoped, tag = 'input window, operand 4, single buffered']
    #allocation8 [shape = 'u8[16384]{0}', space=vmem, size = 0x4000, scoped, tag = 'input window, operand 5, single buffered']
    #allocation9 [shape = 's32[1]{0}', space=sflag, size = 0x4, scoped, tag = 'scoped memory for tpu_custom_call.1']
    #allocation10 [shape = 'u8[512]{0}', space=vmem, size = 0x400, scoped, tag = 'input window, operand 6, single buffered']
    #allocation11 [shape = 'u8[512]{0}', space=vmem, size = 0x400, scoped, tag = 'input window, operand 7, single buffered']
    #allocation12 [shape = 's32[1]{0}', space=sflag, size = 0x4, scoped, tag = 'scoped memory for tpu_custom_call.1']
    #allocation13 [shape = 'u8[512]{0}', space=vmem, size = 0x400, scoped, tag = 'input window, operand 8, single buffered']
    #allocation14 [shape = 'u8[12288]{0}', space=vmem, size = 0x3000, scoped, tag = 'input window, operand 9, single buffered']
    #allocation15 [shape = 's32[1]{0}', space=sflag, size = 0x4, scoped, tag = 'scoped memory for tpu_custom_call.1']
    #allocation16 [shape = 'u8[512]{0}', space=vmem, size = 0x400, scoped, tag = 'input window, operand 10, single buffered']
    #allocation17 [shape = 'u8[512]{0}', space=vmem, size = 0x400, scoped, tag = 'input window, operand 11, single buffered']
    #allocation18 [shape = 's32[1]{0}', space=sflag, size = 0x4, scoped, tag = 'scoped memory for tpu_custom_call.1']
    #allocation19 [shape = 'u8[512]{0}', space=vmem, size = 0x400, scoped, tag = 'input window, operand 12, single buffered']
    #allocation20 [shape = 'u8[512]{0}', space=vmem, size = 0x400, scoped, tag = 'input window, operand 14, single buffered']
    #allocation21 [shape = 's32[1]{0}', space=sflag, size = 0x4, scoped, tag = 'scoped memory for tpu_custom_call.1']
    #allocation22 [shape = 'u8[4096]{0}', space=vmem, size = 0x1000, scoped, tag = 'output window, operand 0, single buffered']
    #allocation23 [shape = 'u8[4096]{0}', space=vmem, size = 0x1000, scoped, tag = 'output window, operand 1, single buffered']
    #allocation24 [shape = 's32[1]{0}', space=sflag, size = 0x4, scoped, tag = 'scoped memory for tpu_custom_call.1']
    %23 = vsyncpa [#allocation3], 0
    %24 = vsyncpa [#allocation6], 0
    %25 = vsyncpa [#allocation9], 0
    %26 = vsyncpa [#allocation12], 0
    %27 = vsyncpa [#allocation15], 0
    %28 = vsyncpa [#allocation18], 0
    %29 = vsyncpa [#allocation21], 0
    %30 = vsyncpa [#allocation4], 0
    %31 = vsyncpa [#allocation24], 0
    // Predicated region
    $region2: #{tpu_custom_call.1} parent=1 // pred_check
      _
    $region3: #{tpu_custom_call.1} parent=1 // pred_check_branch
      %33 = sbr.rel (0) target = $region5
    $region4: #{tpu_custom_call.1} parent=1 // pred_region
      %35 = vsyncadd [#allocation3], 0
      %s37 = sshll.u32 %s0, 4
      %s38 = int_to_ptr.hbm [resolvable:$true] %s37
      %s39 = sshll.u32 [#allocation2], 4
      %s40 = int_to_ptr.vmem [resolvable:$true] %s39
      %42 = dma.hbm_to_vmem [thread:$0]  %s38, 128, %s40, [#allocation3]
    $region5: #{tpu_custom_call.1} parent=1 // pred_fallthru
      _
    // Predicated region
    $region6: #{tpu_custom_call.1} parent=1 // pred_check
      _
    $region7: #{tpu_custom_call.1} parent=1 // pred_check_branch
      %44 = sbr.rel (0) target = $region9
    $region8: #{tpu_custom_call.1} parent=1 // pred_region
      %46 = vsyncadd [#allocation6], 0
      %s47 = sshll.u32 %s1, 4
      %s48 = int_to_ptr.hbm [resolvable:$true] %s47
      %s49 = sshll.u32 [#allocation5], 4
      %s50 = int_to_ptr.vmem [resolvable:$true] %s49
      %55 = dma.hbm_to_vmem [thread:$0]  %s48, 256, %s50, [#allocation6], 64, 64, 4
    $region9: #{tpu_custom_call.1} parent=1 // pred_fallthru
      _
    // Predicated region
    $region10: #{tpu_custom_call.1} parent=1 // pred_check
      _
    $region11: #{tpu_custom_call.1} parent=1 // pred_check_branch
      %57 = sbr.rel (0) target = $region13
    $region12: #{tpu_custom_call.1} parent=1 // pred_region
      _
    $region13: #{tpu_custom_call.1} parent=1 // pred_fallthru
      _
    // Predicated region
    $region14: #{tpu_custom_call.1} parent=1 // pred_check
      _
    $region15: #{tpu_custom_call.1} parent=1 // pred_check_branch
      %59 = sbr.rel (0) target = $region17
    $region16: #{tpu_custom_call.1} parent=1 // pred_region
      _
    $region17: #{tpu_custom_call.1} parent=1 // pred_fallthru
      _
    // Predicated region
    $region18: #{tpu_custom_call.1} parent=1 // pred_check
      _
    $region19: #{tpu_custom_call.1} parent=1 // pred_check_branch
      %61 = sbr.rel (0) target = $region21
    $region20: #{tpu_custom_call.1} parent=1 // pred_region
      %63 = vsyncadd [#allocation6], 0
      %s65 = sshll.u32 %s4, 4
      %s66 = int_to_ptr.hbm [resolvable:$true] %s65
      %s67 = sshll.u32 [#allocation7], 4
      %s68 = int_to_ptr.vmem [resolvable:$true] %s67
      %70 = dma.hbm_to_vmem [thread:$0]  %s66, 16, %s68, [#allocation6]
    $region21: #{tpu_custom_call.1} parent=1 // pred_fallthru
      _
    // Predicated region
    $region22: #{tpu_custom_call.1} parent=1 // pred_check
      _
    $region23: #{tpu_custom_call.1} parent=1 // pred_check_branch
      %72 = sbr.rel (0) target = $region25
    $region24: #{tpu_custom_call.1} parent=1 // pred_region
      %74 = vsyncadd [#allocation9], 0
      %s75 = sshll.u32 %s5, 4
      %s76 = int_to_ptr.hbm [resolvable:$true] %s75
      %s77 = sshll.u32 [#allocation8], 4
      %s78 = int_to_ptr.vmem [resolvable:$true] %s77
      %83 = dma.hbm_to_vmem [thread:$0]  %s76, 512, %s78, [#allocation9], 64, 64, 4
    $region25: #{tpu_custom_call.1} parent=1 // pred_fallthru
      _
    // Predicated region
    $region26: #{tpu_custom_call.1} parent=1 // pred_check
      _
    $region27: #{tpu_custom_call.1} parent=1 // pred_check_branch
      %85 = sbr.rel (0) target = $region29
    $region28: #{tpu_custom_call.1} parent=1 // pred_region
      %87 = vsyncadd [#allocation9], 0
      %s89 = sshll.u32 %s6, 4
      %s90 = int_to_ptr.hbm [resolvable:$true] %s89
      %s91 = sshll.u32 [#allocation10], 4
      %s92 = int_to_ptr.vmem [resolvable:$true] %s91
      %94 = dma.hbm_to_vmem [thread:$0]  %s90, 16, %s92, [#allocation9]
    $region29: #{tpu_custom_call.1} parent=1 // pred_fallthru
      _
    // Predicated region
    $region30: #{tpu_custom_call.1} parent=1 // pred_check
      _
    $region31: #{tpu_custom_call.1} parent=1 // pred_check_branch
      %96 = sbr.rel (0) target = $region33
    $region32: #{tpu_custom_call.1} parent=1 // pred_region
      %98 = vsyncadd [#allocation12], 0
      %s100 = sshll.u32 %s7, 4
      %s101 = int_to_ptr.hbm [resolvable:$true] %s100
      %s102 = sshll.u32 [#allocation11], 4
      %s103 = int_to_ptr.vmem [resolvable:$true] %s102
      %105 = dma.hbm_to_vmem [thread:$0]  %s101, 16, %s103, [#allocation12]
    $region33: #{tpu_custom_call.1} parent=1 // pred_fallthru
      _
    // Predicated region
    $region34: #{tpu_custom_call.1} parent=1 // pred_check
      _
    $region35: #{tpu_custom_call.1} parent=1 // pred_check_branch
      %107 = sbr.rel (0) target = $region37
    $region36: #{tpu_custom_call.1} parent=1 // pred_region
      %109 = vsyncadd [#allocation12], 0
      %s111 = sshll.u32 %s8, 4
      %s112 = int_to_ptr.hbm [resolvable:$true] %s111
      %s113 = sshll.u32 [#allocation13], 4
      %s114 = int_to_ptr.vmem [resolvable:$true] %s113
      %116 = dma.hbm_to_vmem [thread:$0]  %s112, 16, %s114, [#allocation12]
    $region37: #{tpu_custom_call.1} parent=1 // pred_fallthru
      _
    // Predicated region
    $region38: #{tpu_custom_call.1} parent=1 // pred_check
      _
    $region39: #{tpu_custom_call.1} parent=1 // pred_check_branch
      %118 = sbr.rel (0) target = $region41
    $region40: #{tpu_custom_call.1} parent=1 // pred_region
      %120 = vsyncadd [#allocation15], 0
      %s121 = sshll.u32 %s9, 4
      %s122 = int_to_ptr.hbm [resolvable:$true] %s121
      %s123 = sshll.u32 [#allocation14], 4
      %s124 = int_to_ptr.vmem [resolvable:$true] %s123
      %129 = dma.hbm_to_vmem [thread:$0]  %s122, 384, %s124, [#allocation15], 64, 64, 4
    $region41: #{tpu_custom_call.1} parent=1 // pred_fallthru
      _
    // Predicated region
    $region42: #{tpu_custom_call.1} parent=1 // pred_check
      _
    $region43: #{tpu_custom_call.1} parent=1 // pred_check_branch
      %131 = sbr.rel (0) target = $region45
    $region44: #{tpu_custom_call.1} parent=1 // pred_region
      %133 = vsyncadd [#allocation15], 0
      %s135 = sshll.u32 %s10, 4
      %s136 = int_to_ptr.hbm [resolvable:$true] %s135
      %s137 = sshll.u32 [#allocation16], 4
      %s138 = int_to_ptr.vmem [resolvable:$true] %s137
      %140 = dma.hbm_to_vmem [thread:$0]  %s136, 16, %s138, [#allocation15]
    $region45: #{tpu_custom_call.1} parent=1 // pred_fallthru
      _
    // Predicated region
    $region46: #{tpu_custom_call.1} parent=1 // pred_check
      _
    $region47: #{tpu_custom_call.1} parent=1 // pred_check_branch
      %142 = sbr.rel (0) target = $region49
    $region48: #{tpu_custom_call.1} parent=1 // pred_region
      %144 = vsyncadd [#allocation18], 0
      %s146 = sshll.u32 %s11, 4
      %s147 = int_to_ptr.hbm [resolvable:$true] %s146
      %s148 = sshll.u32 [#allocation17], 4
      %s149 = int_to_ptr.vmem [resolvable:$true] %s148
      %151 = dma.hbm_to_vmem [thread:$0]  %s147, 16, %s149, [#allocation18]
    $region49: #{tpu_custom_call.1} parent=1 // pred_fallthru
      _
    // Predicated region
    $region50: #{tpu_custom_call.1} parent=1 // pred_check
      _
    $region51: #{tpu_custom_call.1} parent=1 // pred_check_branch
      %153 = sbr.rel (0) target = $region53
    $region52: #{tpu_custom_call.1} parent=1 // pred_region
      %155 = vsyncadd [#allocation18], 0
      %s157 = sshll.u32 %s12, 4
      %s158 = int_to_ptr.hbm [resolvable:$true] %s157
      %s159 = sshll.u32 [#allocation19], 4
      %s160 = int_to_ptr.vmem [resolvable:$true] %s159
      %162 = dma.hbm_to_vmem [thread:$0]  %s158, 16, %s160, [#allocation18]
    $region53: #{tpu_custom_call.1} parent=1 // pred_fallthru
      _
    // Predicated region
    $region54: #{tpu_custom_call.1} parent=1 // pred_check
      _
    $region55: #{tpu_custom_call.1} parent=1 // pred_check_branch
      %164 = sbr.rel (0) target = $region57
    $region56: #{tpu_custom_call.1} parent=1 // pred_region
      _
    $region57: #{tpu_custom_call.1} parent=1 // pred_fallthru
      _
    // Predicated region
    $region58: #{tpu_custom_call.1} parent=1 // pred_check
      _
    $region59: #{tpu_custom_call.1} parent=1 // pred_check_branch
      %166 = sbr.rel (0) target = $region61
    $region60: #{tpu_custom_call.1} parent=1 // pred_region
      %168 = vsyncadd [#allocation21], 0
      %s170 = sshll.u32 %s14, 4
      %s171 = int_to_ptr.hbm [resolvable:$true] %s170
      %s172 = sshll.u32 [#allocation20], 4
      %s173 = int_to_ptr.vmem [resolvable:$true] %s172
      %175 = dma.hbm_to_vmem [thread:$0]  %s171, 16, %s173, [#allocation21]
    $region61: #{tpu_custom_call.1} parent=1 // pred_fallthru
      _
    // Predicated region
    $region62: #{tpu_custom_call.1} parent=1 // pred_check
      _
    $region63: #{tpu_custom_call.1} parent=1 // pred_check_branch
      %177 = sbr.rel (0) target = $region65
    $region64: #{tpu_custom_call.1} parent=1 // pred_region
      _
    $region65: #{tpu_custom_call.1} parent=1 // pred_fallthru
      _
    // Predicated region
    $region66: #{tpu_custom_call.1} parent=1 // pred_check
      _
    $region67: #{tpu_custom_call.1} parent=1 // pred_check_branch
      %179 = sbr.rel (0) target = $region69
    $region68: #{tpu_custom_call.1} parent=1 // pred_region
      %181 = dma.done [#allocation3], 128
    $region69: #{tpu_custom_call.1} parent=1 // pred_fallthru
      _
    // Predicated region
    $region70: #{tpu_custom_call.1} parent=1 // pred_check
      _
    $region71: #{tpu_custom_call.1} parent=1 // pred_check_branch
      %183 = sbr.rel (0) target = $region73
    $region72: #{tpu_custom_call.1} parent=1 // pred_region
      %185 = dma.done [#allocation6], 256
    $region73: #{tpu_custom_call.1} parent=1 // pred_fallthru
      _
    // Predicated region
    $region74: #{tpu_custom_call.1} parent=1 // pred_check
      _
    $region75: #{tpu_custom_call.1} parent=1 // pred_check_branch
      %187 = sbr.rel (0) target = $region77
    $region76: #{tpu_custom_call.1} parent=1 // pred_region
      %189 = dma.done [#allocation6], 16
    $region77: #{tpu_custom_call.1} parent=1 // pred_fallthru
      _
    // Predicated region
    $region78: #{tpu_custom_call.1} parent=1 // pred_check
      _
    $region79: #{tpu_custom_call.1} parent=1 // pred_check_branch
      %191 = sbr.rel (0) target = $region81
    $region80: #{tpu_custom_call.1} parent=1 // pred_region
      %193 = dma.done [#allocation9], 512
    $region81: #{tpu_custom_call.1} parent=1 // pred_fallthru
      _
    // Predicated region
    $region82: #{tpu_custom_call.1} parent=1 // pred_check
      _
    $region83: #{tpu_custom_call.1} parent=1 // pred_check_branch
      %195 = sbr.rel (0) target = $region85
    $region84: #{tpu_custom_call.1} parent=1 // pred_region
      %197 = dma.done [#allocation9], 16
    $region85: #{tpu_custom_call.1} parent=1 // pred_fallthru
      _
    // Predicated region
    $region86: #{tpu_custom_call.1} parent=1 // pred_check
      _
    $region87: #{tpu_custom_call.1} parent=1 // pred_check_branch
      %199 = sbr.rel (0) target = $region89
    $region88: #{tpu_custom_call.1} parent=1 // pred_region
      %201 = dma.done [#allocation12], 16
    $region89: #{tpu_custom_call.1} parent=1 // pred_fallthru
      _
    // Predicated region
    $region90: #{tpu_custom_call.1} parent=1 // pred_check
      _
    $region91: #{tpu_custom_call.1} parent=1 // pred_check_branch
      %203 = sbr.rel (0) target = $region93
    $region92: #{tpu_custom_call.1} parent=1 // pred_region
      %205 = dma.done [#allocation12], 16
    $region93: #{tpu_custom_call.1} parent=1 // pred_fallthru
      _
    // Predicated region
    $region94: #{tpu_custom_call.1} parent=1 // pred_check
      _
    $region95: #{tpu_custom_call.1} parent=1 // pred_check_branch
      %207 = sbr.rel (0) target = $region97
    $region96: #{tpu_custom_call.1} parent=1 // pred_region
      %209 = dma.done [#allocation15], 384
    $region97: #{tpu_custom_call.1} parent=1 // pred_fallthru
      _
    // Predicated region
    $region98: #{tpu_custom_call.1} parent=1 // pred_check
      _
    $region99: #{tpu_custom_call.1} parent=1 // pred_check_branch
      %211 = sbr.rel (0) target = $region101
    $region100: #{tpu_custom_call.1} parent=1 // pred_region
      %213 = dma.done [#allocation15], 16
    $region101: #{tpu_custom_call.1} parent=1 // pred_fallthru
      _
    // Predicated region
    $region102: #{tpu_custom_call.1} parent=1 // pred_check
      _
    $region103: #{tpu_custom_call.1} parent=1 // pred_check_branch
      %215 = sbr.rel (0) target = $region105
    $region104: #{tpu_custom_call.1} parent=1 // pred_region
      %217 = dma.done [#allocation18], 16
    $region105: #{tpu_custom_call.1} parent=1 // pred_fallthru
      _
    // Predicated region
    $region106: #{tpu_custom_call.1} parent=1 // pred_check
      _
    $region107: #{tpu_custom_call.1} parent=1 // pred_check_branch
      %219 = sbr.rel (0) target = $region109
    $region108: #{tpu_custom_call.1} parent=1 // pred_region
      %221 = dma.done [#allocation18], 16
    $region109: #{tpu_custom_call.1} parent=1 // pred_fallthru
      _
    // Predicated region
    $region110: #{tpu_custom_call.1} parent=1 // pred_check
      _
    $region111: #{tpu_custom_call.1} parent=1 // pred_check_branch
      %223 = sbr.rel (0) target = $region113
    $region112: #{tpu_custom_call.1} parent=1 // pred_region
      %225 = dma.done [#allocation21], 16
    $region113: #{tpu_custom_call.1} parent=1 // pred_fallthru
      _
    %v227 = vld [vmem:[#allocation2] sm:$0xff]
    %v228 = vpack.c.bf16 %v227, %v227
    %v229 = vld [vmem:[#allocation5] sm:$0xf]
    %v230 = vld [vmem:[#allocation5 + $0x4] sm:$0xf]
    %v231 = vld [vmem:[#allocation5 + $0x8] sm:$0xf]
    %v232 = vld [vmem:[#allocation5 + $0xc] sm:$0xf]
    %v233 = vld [vmem:[%s2] sm:$0x1]
    %v235 = vperm.slane %v233, 0
    %v241 = vunpack.c.l.b16 %v229
    %v242 = vunpack.c.l.b16 %v230
    %v243 = vunpack.c.l.b16 %v231
    %v244 = vunpack.c.l.b16 %v232
    %v245 = vpack.c.b16 %v242, %v241
    %v246 = vpack.c.b16 %v244, %v243
    %vm249 = vcmask 261120
    %v251 = vsel %vm249, %v228, 0
    %253 = vmatpush.bf16.msra.mxu0 0
    %254 = vmatpush.bf16.msra.mxu0 0
    %255 = vmatpush.bf16.msra.mxu0 0
    %256 = vmatpush.bf16.msra.mxu0 0
    %257 = vmatpush.bf16.msra.mxu0 0
    %258 = vmatpush.bf16.msra.mxu0 0
    %259 = vmatpush.bf16.msra.mxu0 %v246
    %260 = vmatpush.bf16.msra.mxu0 %v245
    %261 = vmatmul.bf16.gmra.mxu0 %v251
    %v262 = vpop.f32.mrf.mxu0
    %v263 = vadd.f32 %v235, %v262
    %v264 = vpop.f32.mrf.mxu0
    %265 = vdwg.mxu0
    %v266 = vld [vmem:[%s3] sm:$0x1]
    %v267 = vld [vmem:[#allocation7] sm:$0x1]
    %vm268 = vcmask 523264
    %v269 = vsel %vm268, %v263, 0.0
    %270 = vadd.xlane.f32.xlu0 %v269
    %v271 = vpop.xlane.xlu0 %270
    %v272 = vrcp.pop 64.0
    %v273 = vmul.f32 64.0, %v272
    %v274 = vsub.f32 1.0, %v273
    %v275 = vmul.f32 %v272, %v274
    %v276 = vadd.f32 %v272, %v275
    %vm277 = vweird.f32 %v272
    %v278 = vsel %vm277, %v272, %v276
    %v279 = vmul.f32 %v271, %v278
    %v280 = vsub.f32 %v263, %v279
    %v281 = vmul.f32 %v280, %v280
    %v282 = vsel %vm268, %v281, 0.0
    %283 = vadd.xlane.f32.xlu0 %v282
    %v284 = vpop.xlane.xlu0 %283
    %v285 = vmul.f32 %v284, %v278
    %v286 = vadd.f32 %v285, 1e-05
    %v287 = vrsqrt.pop %v286
    %v288 = vmul.f32 %v287, %v286
    %v289 = vmul.f32 %v288, %v287
    %v290 = vmul.f32 0.5, %v289
    %v291 = vsub.f32 1.5, %v290
    %v292 = vmul.f32 %v287, %v291
    %vm293 = vweird.f32 %v286
    %vm294 = vweird.f32 %v287
    %vm295 = vmor %vm293, %vm294
    %v296 = vsel %vm295, %v287, %v292
    %v297 = vmul.f32 %v280, %v296
    %v299 = vperm.slane %v266, 0
    %v301 = vmul.f32 %v297, %v299
    %v303 = vperm.slane %v267, 0
    %v305 = vadd.f32 %v301, %v303
    %v306 = vmin.f32 %v305, 20.0
    %v307 = vmul.f32 %v306, 1.442695
    %v308 = vpow.pop %v307
    %v309 = vadd.f32 %v308, 1.0
    %v310 = vmul.f32 %v309, %v309
    %v311 = vsub.f32 %v310, 1.0
    %v312 = vmul.f32 %v305, %v311
    %v313 = vadd.f32 %v310, 1.0
    %v314 = vrcp.pop %v313
    %v315 = vmul.f32 %v313, %v314
    %v316 = vsub.f32 2.0, %v315
    %v317 = vmul.f32 %v314, %v316
    %v318 = vmul.f32 %v312, %v317
    %v319 = vpack.c.bf16 %v318, %v318
    %v320 = vld [vmem:[#allocation8] sm:$0xf]
    %v321 = vld [vmem:[#allocation8 + $0x4] sm:$0xf]
    %v322 = vld [vmem:[#allocation8 + $0x8] sm:$0xf]
    %v323 = vld [vmem:[#allocation8 + $0xc] sm:$0xf]
    %v324 = vld [vmem:[#allocation8 + $0x10] sm:$0xf]
    %v325 = vld [vmem:[#allocation8 + $0x14] sm:$0xf]
    %v326 = vld [vmem:[#allocation8 + $0x18] sm:$0xf]
    %v327 = vld [vmem:[#allocation8 + $0x1c] sm:$0xf]
    %v328 = vld [vmem:[#allocation10] sm:$0x1]
    %v330 = vperm.slane %v328, 0
    %v340 = vunpack.c.l.b16 %v320
    %v341 = vunpack.c.l.b16 %v321
    %v342 = vunpack.c.l.b16 %v322
    %v343 = vunpack.c.l.b16 %v323
    %v344 = vunpack.c.l.b16 %v324
    %v345 = vunpack.c.l.b16 %v325
    %v346 = vunpack.c.l.b16 %v326
    %v347 = vunpack.c.l.b16 %v327
    %v348 = vpack.c.b16 %v341, %v340
    %v349 = vpack.c.b16 %v343, %v342
    %v350 = vpack.c.b16 %v345, %v344
    %v351 = vpack.c.b16 %v347, %v346
    %v357 = vsel %vm268, %v319, 0
    %359 = vmatpush.bf16.msra.mxu0 0
    %360 = vmatpush.bf16.msra.mxu0 0
    %361 = vmatpush.bf16.msra.mxu0 0
    %362 = vmatpush.bf16.msra.mxu0 0
    %363 = vmatpush.bf16.msra.mxu0 %v351
    %364 = vmatpush.bf16.msra.mxu0 %v350
    %365 = vmatpush.bf16.msra.mxu0 %v349
    %366 = vmatpush.bf16.msra.mxu0 %v348
    %367 = vmatmul.bf16.gmra.mxu0 %v357
    %v368 = vpop.f32.mrf.mxu0
    %v369 = vadd.f32 %v330, %v368
    %v370 = vpop.f32.mrf.mxu0
    %371 = vdwg.mxu0
    %v372 = vmul.f32 %v369, 1.442695
    %v373 = vpow.pop %v372
    %374 = vst.msk [vmem:[#allocation22] sm:$0xff] %vm249, %v373
    %v375 = vld [vmem:[#allocation11] sm:$0x1]
    %v376 = vld [vmem:[#allocation13] sm:$0x1]
    %378 = vrot.lane.b32.xlu0 %v369, 96
    %v379 = vpop.permute.xlu0 %378
    %vm381 = vcmask 392192
    %v382 = vsel %vm381, %v379, 0.0
    %383 = vadd.xlane.f32.xlu0 %v382
    %v384 = vpop.xlane.xlu0 %383
    %v385 = vrcp.pop 48.0
    %v386 = vmul.f32 48.0, %v385
    %v387 = vsub.f32 1.0, %v386
    %v388 = vmul.f32 %v385, %v387
    %v389 = vadd.f32 %v385, %v388
    %vm390 = vweird.f32 %v385
    %v391 = vsel %vm390, %v385, %v389
    %v392 = vmul.f32 %v384, %v391
    %v393 = vsub.f32 %v369, %v392
    %v394 = vmul.f32 %v393, %v393
    %396 = vrot.lane.b32.xlu0 %v394, 96
    %v397 = vpop.permute.xlu0 %396
    %v399 = vsel %vm381, %v397, 0.0
    %400 = vadd.xlane.f32.xlu0 %v399
    %v401 = vpop.xlane.xlu0 %400
    %v402 = vmul.f32 %v401, %v391
    %v403 = vadd.f32 %v402, 1e-05
    %v404 = vrsqrt.pop %v403
    %v405 = vmul.f32 %v404, %v403
    %v406 = vmul.f32 %v405, %v404
    %v407 = vmul.f32 0.5, %v406
    %v408 = vsub.f32 1.5, %v407
    %v409 = vmul.f32 %v404, %v408
    %vm410 = vweird.f32 %v403
    %vm411 = vweird.f32 %v404
    %vm412 = vmor %vm410, %vm411
    %v413 = vsel %vm412, %v404, %v409
    %v414 = vmul.f32 %v393, %v413
    %v416 = vperm.slane %v375, 0
    %417 = vrot.lane.b32.xlu0 %v416, 32
    %v418 = vpop.permute.xlu0 %417
    %v420 = vmul.f32 %v414, %v418
    %v422 = vperm.slane %v376, 0
    %423 = vrot.lane.b32.xlu0 %v422, 32
    %v424 = vpop.permute.xlu0 %423
    %v426 = vadd.f32 %v420, %v424
    %v427 = vmax.f32 %v426, 0.0
    %v428 = vpack.c.bf16 %v427, %v427
    %v429 = vld [vmem:[#allocation14] sm:$0xf]
    %v430 = vld [vmem:[#allocation14 + $0x4] sm:$0xf]
    %v431 = vld [vmem:[#allocation14 + $0x8] sm:$0xf]
    %v432 = vld [vmem:[#allocation14 + $0xc] sm:$0xf]
    %v433 = vld [vmem:[#allocation14 + $0x10] sm:$0xf]
    %v434 = vld [vmem:[#allocation14 + $0x14] sm:$0xf]
    %v435 = vld [vmem:[#allocation16] sm:$0x1]
    %v437 = vperm.slane %v435, 0
    %440 = vrot.lane.b32.xlu0 %v428, 96
    %v441 = vpop.permute.xlu0 %440
    %v448 = vunpack.c.l.b16 %v429
    %v449 = vunpack.c.l.b16 %v430
    %v450 = vunpack.c.l.b16 %v431
    %v451 = vunpack.c.l.b16 %v432
    %v452 = vunpack.c.l.b16 %v433
    %v453 = vunpack.c.l.b16 %v434
    %v454 = vpack.c.b16 %v449, %v448
    %v455 = vpack.c.b16 %v451, %v450
    %v456 = vpack.c.b16 %v453, %v452
    %v461 = vsel %vm381, %v441, 0
    %463 = vmatpush.bf16.msra.mxu0 0
    %464 = vmatpush.bf16.msra.mxu0 0
    %465 = vmatpush.bf16.msra.mxu0 0
    %466 = vmatpush.bf16.msra.mxu0 0
    %467 = vmatpush.bf16.msra.mxu0 0
    %468 = vmatpush.bf16.msra.mxu0 %v456
    %469 = vmatpush.bf16.msra.mxu0 %v455
    %470 = vmatpush.bf16.msra.mxu0 %v454
    %471 = vmatmul.bf16.gmra.mxu0 %v461
    %v472 = vpop.f32.mrf.mxu0
    %v473 = vadd.f32 %v437, %v472
    %v474 = vpop.f32.mrf.mxu0
    %475 = vdwg.mxu0
    %v476 = vld [vmem:[%s15] sm:$0xff]
    %v477 = vld [vmem:[%s15 + $0x8] sm:$0xff]
    %v478 = vld [vmem:[%s15 + $0x10] sm:$0xff]
    %v479 = vld [vmem:[%s15 + $0x18] sm:$0xff]
    %v480 = vld [vmem:[%s15 + $0x20] sm:$0xff]
    %v481 = vld [vmem:[%s15 + $0x28] sm:$0xff]
    %v482 = vld [vmem:[%s15 + $0x30] sm:$0xff]
    %v483 = vld [vmem:[%s15 + $0x38] sm:$0xff]
    %v484 = vld [vmem:[%s15 + $0x40] sm:$0xff]
    %v485 = vld [vmem:[%s15 + $0x48] sm:$0xff]
    %v486 = vld [vmem:[%s15 + $0x50] sm:$0xff]
    %v487 = vld [vmem:[%s15 + $0x58] sm:$0xff]
    %vm488 = vcmask 785408
    %v490 = vsel %vm488, %v473, 0
    %492 = vmatpush.msra.mxu0 0.0
    %493 = vmatpush.msra.mxu0 0.0
    %494 = vmatpush.msra.mxu0 0.0
    %495 = vmatpush.msra.mxu0 0.0
    %496 = vmatpush.msra.mxu0 %v487
    %497 = vmatpush.msra.mxu0 %v486
    %498 = vmatpush.msra.mxu0 %v485
    %499 = vmatpush.msra.mxu0 %v484
    %500 = vmatpush.msra.mxu0 %v483
    %501 = vmatpush.msra.mxu0 %v482
    %502 = vmatpush.msra.mxu0 %v481
    %503 = vmatpush.msra.mxu0 %v480
    %504 = vmatpush.msra.mxu0 %v479
    %505 = vmatpush.msra.mxu0 %v478
    %506 = vmatpush.msra.mxu0 %v477
    %507 = vmatpush.msra.mxu0 %v476
    %508 = vmatmul.f32.gmra.mxu0 %v490
    %v509 = vpop.f32.mrf.mxu0
    %v510 = vadd.f32 0.0, %v509
    %511 = vdwg.mxu0
    %v512 = vsub.f32 %v473, %v510
    %v513 = vmul.f32 %v512, %v512
    %v515 = vsel %vm488, %v513, 0
    %517 = vmatpush.msra.mxu0 0.0
    %518 = vmatpush.msra.mxu0 0.0
    %519 = vmatpush.msra.mxu0 0.0
    %520 = vmatpush.msra.mxu0 0.0
    %521 = vmatpush.msra.mxu0 %v487
    %522 = vmatpush.msra.mxu0 %v486
    %523 = vmatpush.msra.mxu0 %v485
    %524 = vmatpush.msra.mxu0 %v484
    %525 = vmatpush.msra.mxu0 %v483
    %526 = vmatpush.msra.mxu0 %v482
    %527 = vmatpush.msra.mxu0 %v481
    %528 = vmatpush.msra.mxu0 %v480
    %529 = vmatpush.msra.mxu0 %v479
    %530 = vmatpush.msra.mxu0 %v478
    %531 = vmatpush.msra.mxu0 %v477
    %532 = vmatpush.msra.mxu0 %v476
    %533 = vmatmul.f32.gmra.mxu0 %v515
    %v534 = vpop.f32.mrf.mxu0
    %v535 = vadd.f32 1e-05, %v534
    %536 = vdwg.mxu0
    %v537 = vrsqrt.pop %v535
    %v538 = vmul.f32 %v537, %v535
    %v539 = vmul.f32 %v538, %v537
    %v540 = vmul.f32 0.5, %v539
    %v541 = vsub.f32 1.5, %v540
    %v542 = vmul.f32 %v537, %v541
    %vm543 = vweird.f32 %v535
    %vm544 = vweird.f32 %v537
    %vm545 = vmor %vm543, %vm544
    %v546 = vsel %vm545, %v537, %v542
    %v547 = vmul.f32 %v512, %v546
    %v548 = vld [vmem:[#allocation17] sm:$0x1]
    %v550 = vperm.slane %v548, 0
    %v552 = vmul.f32 %v547, %v550
    %v553 = vld [vmem:[#allocation19] sm:$0x1]
    %v555 = vperm.slane %v553, 0
    %v557 = vadd.f32 %v552, %v555
    %v558 = vmin.f32 %v557, 20.0
    %v559 = vmul.f32 %v558, 1.442695
    %v560 = vpow.pop %v559
    %v561 = vadd.f32 %v560, 1.0
    %v562 = vmul.f32 %v561, %v561
    %v563 = vsub.f32 %v562, 1.0
    %v564 = vmul.f32 %v557, %v563
    %v565 = vadd.f32 %v562, 1.0
    %v566 = vrcp.pop %v565
    %v567 = vmul.f32 %v565, %v566
    %v568 = vsub.f32 2.0, %v567
    %v569 = vmul.f32 %v566, %v568
    %v570 = vmul.f32 %v564, %v569
    %v571 = vpack.c.bf16 %v570, %v570
    %v572 = vld [vmem:[%s13] sm:$0xf]
    %v573 = vld [vmem:[%s13 + $0x4] sm:$0xf]
    %v574 = vld [vmem:[%s13 + $0x8] sm:$0xf]
    %v575 = vld [vmem:[%s13 + $0xc] sm:$0xf]
    %v576 = vld [vmem:[%s13 + $0x10] sm:$0xf]
    %v577 = vld [vmem:[%s13 + $0x14] sm:$0xf]
    %v578 = vld [vmem:[%s13 + $0x18] sm:$0xf]
    %v579 = vld [vmem:[%s13 + $0x1c] sm:$0xf]
    %v580 = vld [vmem:[%s13 + $0x20] sm:$0xf]
    %v581 = vld [vmem:[%s13 + $0x24] sm:$0xf]
    %v582 = vld [vmem:[%s13 + $0x28] sm:$0xf]
    %v583 = vld [vmem:[%s13 + $0x2c] sm:$0xf]
    %v584 = vld [vmem:[#allocation20] sm:$0x1]
    %v586 = vperm.slane %v584, 0
    %v600 = vunpack.c.l.b16 %v572
    %v601 = vunpack.c.l.b16 %v573
    %v602 = vunpack.c.l.b16 %v574
    %v603 = vunpack.c.l.b16 %v575
    %v604 = vunpack.c.l.b16 %v576
    %v605 = vunpack.c.l.b16 %v577
    %v606 = vunpack.c.l.b16 %v578
    %v607 = vunpack.c.l.b16 %v579
    %v608 = vunpack.c.l.b16 %v580
    %v609 = vunpack.c.l.b16 %v581
    %v610 = vunpack.c.l.b16 %v582
    %v611 = vunpack.c.l.b16 %v583
    %v612 = vpack.c.b16 %v601, %v600
    %v613 = vpack.c.b16 %v603, %v602
    %v614 = vpack.c.b16 %v605, %v604
    %v615 = vpack.c.b16 %v607, %v606
    %v616 = vpack.c.b16 %v609, %v608
    %v617 = vpack.c.b16 %v611, %v610
    %v625 = vsel %vm488, %v571, 0
    %627 = vmatpush.bf16.msra.mxu0 0
    %628 = vmatpush.bf16.msra.mxu0 0
    %629 = vmatpush.bf16.msra.mxu0 %v617
    %630 = vmatpush.bf16.msra.mxu0 %v616
    %631 = vmatpush.bf16.msra.mxu0 %v615
    %632 = vmatpush.bf16.msra.mxu0 %v614
    %633 = vmatpush.bf16.msra.mxu0 %v613
    %634 = vmatpush.bf16.msra.mxu0 %v612
    %635 = vmatmul.bf16.gmra.mxu0 %v625
    %v636 = vpop.f32.mrf.mxu0
    %v637 = vadd.f32 %v586, %v636
    %v638 = vpop.f32.mrf.mxu0
    %639 = vdwg.mxu0
    %v640 = vmax.f32 %v637, -30.0
    %v641 = vsub.f32 0.0, %v640
    %v642 = vmul.f32 %v641, 1.442695
    %v643 = vpow.pop %v642
    %v644 = vadd.f32 %v643, 1.0
    %v645 = vrcp.pop %v644
    %v646 = vmul.f32 %v644, %v645
    %v647 = vsub.f32 2.0, %v646
    %v648 = vmul.f32 %v645, %v647
    %vm649 = vcmask 588800
    %650 = vst.msk [vmem:[#allocation23] sm:$0xff] %vm649, %v648
    // Predicated region
    $region114: #{tpu_custom_call.1} parent=1 // pred_check
      _
    $region115: #{tpu_custom_call.1} parent=1 // pred_check_branch
      %652 = sbr.rel (0) target = $region117
    $region116: #{tpu_custom_call.1} parent=1 // pred_region
      %654 = vsyncadd [#allocation4], 0
      %s656 = sshll.u32 [#allocation22], 4
      %s657 = int_to_ptr.vmem [resolvable:$true] %s656
      %s658 = sshll.u32 %s16, 4
      %s659 = int_to_ptr.hbm [resolvable:$true] %s658
      %661 = dma.vmem_to_hbm [thread:$0]  %s657, 128, %s659, [#allocation4]
    $region117: #{tpu_custom_call.1} parent=1 // pred_fallthru
      _
    // Predicated region
    $region118: #{tpu_custom_call.1} parent=1 // pred_check
      _
    $region119: #{tpu_custom_call.1} parent=1 // pred_check_branch
      %663 = sbr.rel (0) target = $region121
    $region120: #{tpu_custom_call.1} parent=1 // pred_region
      %665 = vsyncadd [#allocation24], 0
      %s667 = sshll.u32 [#allocation23], 4
      %s668 = int_to_ptr.vmem [resolvable:$true] %s667
      %s669 = sshll.u32 %s17, 4
      %s670 = int_to_ptr.hbm [resolvable:$true] %s669
      %672 = dma.vmem_to_hbm [thread:$0]  %s668, 128, %s670, [#allocation24]
    $region121: #{tpu_custom_call.1} parent=1 // pred_fallthru
      _
    // Predicated region
    $region122: #{tpu_custom_call.1} parent=1 // pred_check
      _
    $region123: #{tpu_custom_call.1} parent=1 // pred_check_branch
      %674 = sbr.rel (0) target = $region125
    $region124: #{tpu_custom_call.1} parent=1 // pred_region
      %676 = dma.done [#allocation4], 128
    $region125: #{tpu_custom_call.1} parent=1 // pred_fallthru
      _
    // Predicated region
    $region126: #{tpu_custom_call.1} parent=1 // pred_check
      _
    $region127: #{tpu_custom_call.1} parent=1 // pred_check_branch
      %678 = sbr.rel (0) target = $region129
    $region128: #{tpu_custom_call.1} parent=1 // pred_region
      %680 = dma.done [#allocation24], 128
    $region129: #{tpu_custom_call.1} parent=1 // pred_fallthru
      _
    %681 = vsyncpa [#allocation3], 1
    %682 = vsyncpa [#allocation6], 1
    %683 = vsyncpa [#allocation9], 1
    %684 = vsyncpa [#allocation12], 1
    %685 = vsyncpa [#allocation15], 1
    %686 = vsyncpa [#allocation18], 1
    %687 = vsyncpa [#allocation21], 1
    %688 = vsyncpa [#allocation4], 1
    %689 = vsyncpa [#allocation24], 1

</llo_original>
